<compile_context>
chip_gen: v5e
topology: v5e:2x2
jax: 0.10.0
libtpu: 0.0.40
codegen_flags: <defaults>
</compile_context>

<pallas_src>
import functools

import jax
import jax.numpy as jnp
from jax.experimental import pallas as pl
from jax.experimental.pallas import tpu as pltpu

EPS = 1e-5

# MXU operand dtype. jnp.float32 keeps ~1e-6 parity with the f32 XLA reference.
# On v6e/v7x set to jnp.bfloat16 for full-rate MXU issue and half the weight DMA
# (accumulation stays f32 via preferred_element_type; expect ~1e-2-level deviations).
MXU_DTYPE = jnp.float32


# ----------------------------------------------------------------------------
# Trace-time helper: per-kernel-row Toeplitz weight matrices (UNPADDED width)
# ----------------------------------------------------------------------------
def _toeplitz_weights(w, w_in, w_out, pad, stride, dtype):
    """(KH,KW,Cin,Cout) conv weights -> (KH, w_in*Cin, w_out*Cout) banded matrices.

    For an UNPADDED input row flattened as (w_in*Cin,), the contribution of
    kernel-row kh to the flattened output row (w_out*Cout,) is  row @ T[kh].
    Width zero-padding is folded into the matrices (out-of-range taps -> zero rows),
    so no always-zero lane-padding columns are carried through the matmul.
    """
    KH, KW, Cin, Cout = w.shape
    col = jnp.arange(w_out)[:, None] * stride - pad + jnp.arange(KW)[None, :]  # (w_out, KW)
    rows = col[:, :, None] * Cin + jnp.arange(Cin)[None, None, :]              # (w_out, KW, Cin)
    valid = (col >= 0) & (col < w_in)
    rows = jnp.where(valid[:, :, None], rows, -1)          # -1 / out-of-range -> zero one-hot
    onehot = jax.nn.one_hot(rows, w_in * Cin, dtype=jnp.float32)  # (w_out, KW, Cin, w_in*Cin)
    t = jnp.einsum("wkip,hkio->hpwo", onehot, w.astype(jnp.float32))
    return t.reshape(KH, w_in * Cin, w_out * Cout).astype(dtype)


# ----------------------------------------------------------------------------
# Fused kernel: conv1 + BN1 + ReLU + conv2 + BN2 + ReLU
# ----------------------------------------------------------------------------
def _make_fused_kernel(N, H, W, Cin, Cout, k, pad, stride):
    Hp1 = H + 2 * pad
    H1 = (Hp1 - k) // stride + 1
    W1 = (W + 2 * pad - k) // stride + 1
    # The module's second Conv2d is fixed by the PyTorch spec: kernel 3, pad 1, stride 1.
    K2, PAD2 = 3, 1
    Hp2 = H1 + 2 * PAD2
    WC = W1 * Cout                 # lane width of every activation (=128 here)
    NH = N * H1

    def conv_rows(pad_ref, wt_ref, kh_count, cols_in, stride_):
        acc = jnp.zeros((NH, WC), jnp.float32)
        for kh in range(kh_count):                       # static, unrolled
            if stride_ == 1:
                lhs = pad_ref[:, kh:kh + H1, :]
            else:
                xp = pad_ref[...]
                lhs = jax.lax.slice(
                    xp, (0, kh, 0),
                    (xp.shape[0], kh + (H1 - 1) * stride_ + 1, xp.shape[2]),
                    (1, stride_, 1))
            lhs = lhs.reshape(NH, cols_in).astype(MXU_DTYPE)
            acc = acc + jnp.dot(lhs, wt_ref[kh].astype(MXU_DTYPE),
                                preferred_element_type=jnp.float32)
        return acc

    def kernel(x_ref, w1_ref, w2_ref, bn_ref, o_ref, xpad_ref, apad_ref):
        # Per-channel replicate matrix generated in-kernel (no HBM input):
        # rep[p, q] = 1 iff lanes p and q carry the same channel (lane % Cout).
        li = jax.lax.broadcasted_iota(jnp.int32, (WC, WC), 0)
        lj = jax.lax.broadcasted_iota(jnp.int32, (WC, WC), 1)
        rep = ((li % Cout) == (lj % Cout)).astype(jnp.float32)        # (WC, WC)
        inv_count = 1.0 / float(N * H1 * W1)

        def bn_relu(y, g_vec, b_vec):
            # Train-mode BatchNorm.  Row-reduce FIRST (VPU/XLU), then a tiny
            # (1,WC)@(WC,WC) matmul replicates per-channel sums across the W1 lane
            # groups.  Two-pass (centered) variance, all f32.
            s = jnp.sum(y, axis=0, keepdims=True)                     # (1, WC)
            mean = jnp.dot(s, rep, preferred_element_type=jnp.float32) * inv_count
            d = y - mean
            ss = jnp.sum(d * d, axis=0, keepdims=True)                # (1, WC)
            var = jnp.dot(ss, rep, preferred_element_type=jnp.float32) * inv_count
            scale = g_vec * jax.lax.rsqrt(var + EPS)
            return jnp.maximum(d * scale + b_vec, 0.0)

        # --- zero only the H-halo rows; width padding lives in the Toeplitz mats ----
        if pad > 0:
            xpad_ref[:, 0:pad, :] = jnp.zeros((N, pad, W * Cin), xpad_ref.dtype)
            xpad_ref[:, pad + H:Hp1, :] = jnp.zeros((N, pad, W * Cin), xpad_ref.dtype)
        xpad_ref[:, pad:pad + H, :] = x_ref[...]                      # full-lane store

        # --- conv1 (bias folded away by train-mode BN) + BN1 + ReLU -----------------
        y1 = conv_rows(xpad_ref, w1_ref, k, W * Cin, stride)          # (NH, WC)
        a1 = bn_relu(y1, bn_ref[0:1, :], bn_ref[1:2, :])              # (NH, WC)

        # --- H halo for the second conv ----------------------------------------------
        apad_ref[:, 0:PAD2, :] = jnp.zeros((N, PAD2, WC), apad_ref.dtype)
        apad_ref[:, PAD2 + H1:Hp2, :] = jnp.zeros((N, PAD2, WC), apad_ref.dtype)
        apad_ref[:, PAD2:PAD2 + H1, :] = a1.reshape(N, H1, WC)        # full-lane store

        # --- conv2 + BN2 + ReLU -> lane-dense (N*H1, W1*Cout) output -----------------
        y2 = conv_rows(apad_ref, w2_ref, K2, W1 * Cout, 1)            # (NH, WC)
        o_ref[...] = bn_relu(y2, bn_ref[2:3, :], bn_ref[3:4, :])

    return kernel


# ----------------------------------------------------------------------------
# Full forward pass (interface: NCHW, like the PyTorch module)
# ----------------------------------------------------------------------------
@functools.partial(jax.jit, static_argnames=("kernel_size", "padding", "stride"))
def conv2d_block_forward(x_nchw, params, *, kernel_size=3, padding=1, stride=1):
    N, Cin, H, W = x_nchw.shape
    Cout = params["w1"].shape[-1]
    k = kernel_size
    H1 = (H + 2 * padding - k) // stride + 1
    W1 = (W + 2 * padding - k) // stride + 1
    WC = W1 * Cout
    NH = N * H1

    # NHWC with (W, C) flattened onto the lane axis (lane-dense layout).
    x = jnp.transpose(x_nchw, (0, 2, 3, 1)).astype(jnp.float32).reshape(N, H, W * Cin)

    # Toeplitz weight matrices over the UNPADDED width: each conv is KH matmuls with
    # K = W*Cin (64) / W1*Cout (128) instead of KH*KW matmuls with K = Cin/Cout.
    wb1 = _toeplitz_weights(params["w1"], W, W1, padding, stride, MXU_DTYPE)   # (k, W*Cin, WC)
    wb2 = _toeplitz_weights(params["w2"], W1, W1, 1, 1, MXU_DTYPE)             # (3, WC, WC)

    # All four BN affine vectors packed into ONE (4, WC) lane-dense input.
    lane_vec = lambda v: jnp.tile(v.astype(jnp.float32), W1)                   # (WC,)
    bn_packed = jnp.stack([lane_vec(params["g1"]), lane_vec(params["beta1"]),
                           lane_vec(params["g2"]), lane_vec(params["beta2"])]) # (4, WC)
    # NOTE: conv biases b1/b2 are intentionally NOT passed to the kernel: a per-channel
    # constant added before a *train-mode* BatchNorm cancels exactly when the batch
    # mean is subtracted.  Guard/revisit if eval-mode running stats are ever used.

    out2d = pl.pallas_call(
        _make_fused_kernel(N, H, W, Cin, Cout, k, padding, stride),
        out_shape=jax.ShapeDtypeStruct((NH, WC), jnp.float32),
        grid=(1,),
        in_specs=[
            pl.BlockSpec((N, H, W * Cin), lambda i: (0, 0, 0)),
            pl.BlockSpec(wb1.shape, lambda i: (0, 0, 0)),
            pl.BlockSpec(wb2.shape, lambda i: (0, 0, 0)),
            pl.BlockSpec((4, WC), lambda i: (0, 0)),
        ],
        out_specs=pl.BlockSpec((NH, WC), lambda i: (0, 0)),
        scratch_shapes=[
            pltpu.VMEM((N, H + 2 * padding, W * Cin), jnp.float32),   # H-padded input
            pltpu.VMEM((N, H1 + 2, WC), jnp.float32),                 # H-padded activation
        ],
        compiler_params=pltpu.CompilerParams(
            # Training-mode BatchNorm couples all samples through the batch stats and
            # everything fits comfortably in VMEM, so a single grid step is used.
            # The single-call cost is launch/DMA-descriptor bound at this size; if the
            # encoder applies this block repeatedly, amortize by fusing more layers or
            # batching more images per call rather than micro-tuning this one.
            # TODO(synk): on v7x (2 TensorCores) switch to a 2-wide "parallel" grid over
            # row-bands/N with a cross-core BN-stats reduction once shapes grow, and
            # re-derive tiling against v7x's 64 MiB VMEM.
            dimension_semantics=("arbitrary",),
            vmem_limit_bytes=32 * 1024 * 1024,
        ),
    )(x, wb1, wb2, bn_packed)

    out = out2d.reshape(N, H1, W1, Cout)
    return jnp.transpose(out, (0, 3, 1, 2))                           # NHWC -> NCHW


# ----------------------------------------------------------------------------
# Pure-JAX reference (lax.conv, includes the conv biases) for correctness check
# ----------------------------------------------------------------------------
def reference_forward(x_nchw, params, *, kernel_size=3, padding=1, stride=1):
    x = jnp.transpose(x_nchw, (0, 2, 3, 1)).astype(jnp.float32)
    dn = ("NHWC", "HWIO", "NHWC")

    def block(x, w, b, g, beta, pad, s):
        y = jax.lax.conv_general_dilated(
            x, w, (s, s), [(pad, pad)] * 2,
            dimension_numbers=dn) + b.reshape(1, 1, 1, -1)
        m = jnp.mean(y, axis=(0, 1, 2))
        v = jnp.var(y, axis=(0, 1, 2))
        return jnp.maximum((y - m) / jnp.sqrt(v + EPS) * g + beta, 0.0)

    a1 = block(x, params["w1"], params["b1"], params["g1"], params["beta1"],
               padding, stride)
    a2 = block(a1, params["w2"], params["b2"], params["g2"], params["beta2"], 1, 1)
    return jnp.transpose(a2, (0, 3, 1, 2))


if __name__ == "__main__":
    # Module config: Conv2D(c_in=4, c_out=8, kernel_size=3, padding=1, stride=1)
    c_in, c_out, k, padding, stride = 4, 8, 3, 1, 1
    N, H, W = 2, 16, 16

    key = jax.random.PRNGKey(0)
    ks = jax.random.split(key, 9)
    params = {
        "w1": 0.2 * jax.random.normal(ks[0], (k, k, c_in, c_out), jnp.float32),
        "b1": 0.1 * jax.random.normal(ks[1], (c_out,), jnp.float32),
        "g1": 1.0 + 0.1 * jax.random.normal(ks[2], (c_out,), jnp.float32),
        "beta1": 0.1 * jax.random.normal(ks[3], (c_out,), jnp.float32),
        "w2": 0.2 * jax.random.normal(ks[4], (3, 3, c_out, c_out), jnp.float32),
        "b2": 0.1 * jax.random.normal(ks[5], (c_out,), jnp.float32),
        "g2": 1.0 + 0.1 * jax.random.normal(ks[6], (c_out,), jnp.float32),
        "beta2": 0.1 * jax.random.normal(ks[7], (c_out,), jnp.float32),
    }
    x = jax.random.normal(ks[8], (N, c_in, H, W), jnp.float32)

    out = conv2d_block_forward(x, params, kernel_size=k, padding=padding, stride=stride)
    out = jax.block_until_ready(out)

    ref = reference_forward(x, params, kernel_size=k, padding=padding, stride=stride)
    assert out.shape == (N, c_out, H, W), out.shape
    tol = 1e-4 if MXU_DTYPE == jnp.float32 else 3e-2   # loosen if bf16 MXU operands
    max_err = float(jnp.max(jnp.abs(out - ref)))
    assert jnp.allclose(out, ref, atol=tol, rtol=tol), max_err

    print("KERNEL_OK")
</pallas_src>

<mosaic_0001>
module attributes {stable_mosaic.version = 11 : i64} {
  func.func @kernel(%arg0: i32, %arg1: memref<2x16x64xf32, #tpu.memory_space<vmem>>, %arg2: memref<3x64x128xf32, #tpu.memory_space<vmem>>, %arg3: memref<3x128x128xf32, #tpu.memory_space<vmem>>, %arg4: memref<4x128xf32, #tpu.memory_space<vmem>>, %arg5: memref<32x128xf32, #tpu.memory_space<vmem>>, %arg6: memref<2x18x64xf32, #tpu.memory_space<vmem>>, %arg7: memref<2x18x128xf32, #tpu.memory_space<vmem>>) attributes {dimension_semantics = [#tpu.dimension_semantics<arbitrary>], iteration_bounds = array<i64: 1>, scalar_prefetch = 0 : i64, scratch_operands = 2 : i64, tpu.core_type = #tpu.core_type<tc>, window_params = [{pipeline_mode = #tpu.pipeline_mode<synchronous>, transform_indices = @transform_0, window_bounds = array<i64: 2, 16, 64>}, {pipeline_mode = #tpu.pipeline_mode<synchronous>, transform_indices = @transform_1, window_bounds = array<i64: 3, 64, 128>}, {pipeline_mode = #tpu.pipeline_mode<synchronous>, transform_indices = @transform_2, window_bounds = array<i64: 3, 128, 128>}, {pipeline_mode = #tpu.pipeline_mode<synchronous>, transform_indices = @transform_3, window_bounds = array<i64: 4, 128>}, {pipeline_mode = #tpu.pipeline_mode<synchronous>, transform_indices = @transform_4, window_bounds = array<i64: 32, 128>}]} {
    %0 = tpu.iota {dimensions = array<i32: 0>} : vector<128x128xi32>
    %1 = tpu.iota {dimensions = array<i32: 1>} : vector<128x128xi32>
    %c8_i32 = arith.constant 8 : i32
    %c0_i32 = arith.constant 0 : i32
    %2 = arith.cmpi eq, %c8_i32, %c0_i32 : i32
    %c1_i32 = arith.constant 1 : i32
    %3 = arith.select %2, %c1_i32, %c8_i32 : i32
    %4 = vector.broadcast %3 : i32 to vector<128x128xi32>
    %5 = arith.remsi %0, %4 : vector<128x128xi32>
    %c0_i32_0 = arith.constant 0 : i32
    %6 = vector.broadcast %c0_i32_0 : i32 to vector<128x128xi32>
    %7 = arith.cmpi ne, %5, %6 : vector<128x128xi32>
    %c0_i32_1 = arith.constant 0 : i32
    %8 = vector.broadcast %c0_i32_1 : i32 to vector<128x128xi32>
    %9 = arith.cmpi slt, %5, %8 : vector<128x128xi32>
    %c0_i32_2 = arith.constant 0 : i32
    %10 = arith.cmpi slt, %3, %c0_i32_2 : i32
    %11 = vector.broadcast %10 : i1 to vector<128x128xi1>
    %12 = vector.broadcast %11 : vector<128x128xi1> to vector<128x128xi1>
    %13 = arith.xori %9, %12 : vector<128x128xi1>
    %14 = arith.andi %13, %7 : vector<128x128xi1>
    %15 = vector.broadcast %3 : i32 to vector<128x128xi32>
    %16 = arith.addi %5, %15 : vector<128x128xi32>
    %17 = arith.select %14, %16, %5 : vector<128x128xi1>, vector<128x128xi32>
    %c8_i32_3 = arith.constant 8 : i32
    %c0_i32_4 = arith.constant 0 : i32
    %18 = arith.cmpi eq, %c8_i32_3, %c0_i32_4 : i32
    %c1_i32_5 = arith.constant 1 : i32
    %19 = arith.select %18, %c1_i32_5, %c8_i32_3 : i32
    %20 = vector.broadcast %19 : i32 to vector<128x128xi32>
    %21 = arith.remsi %1, %20 : vector<128x128xi32>
    %c0_i32_6 = arith.constant 0 : i32
    %22 = vector.broadcast %c0_i32_6 : i32 to vector<128x128xi32>
    %23 = arith.cmpi ne, %21, %22 : vector<128x128xi32>
    %c0_i32_7 = arith.constant 0 : i32
    %24 = vector.broadcast %c0_i32_7 : i32 to vector<128x128xi32>
    %25 = arith.cmpi slt, %21, %24 : vector<128x128xi32>
    %c0_i32_8 = arith.constant 0 : i32
    %26 = arith.cmpi slt, %19, %c0_i32_8 : i32
    %27 = vector.broadcast %26 : i1 to vector<128x128xi1>
    %28 = vector.broadcast %27 : vector<128x128xi1> to vector<128x128xi1>
    %29 = arith.xori %25, %28 : vector<128x128xi1>
    %30 = arith.andi %29, %23 : vector<128x128xi1>
    %31 = vector.broadcast %19 : i32 to vector<128x128xi32>
    %32 = arith.addi %21, %31 : vector<128x128xi32>
    %33 = arith.select %30, %32, %21 : vector<128x128xi1>, vector<128x128xi32>
    %34 = arith.cmpi eq, %17, %33 : vector<128x128xi32>
    %35 = arith.extui %34 : vector<128x128xi1> to vector<128x128xi32>
    %36 = arith.sitofp %35 : vector<128x128xi32> to vector<128x128xf32>
    %cst = arith.constant 0.000000e+00 : f32
    %37 = vector.broadcast %cst : f32 to vector<2x1x64xf32>
    %c0 = arith.constant 0 : index
    %c0_9 = arith.constant 0 : index
    %c0_10 = arith.constant 0 : index
    %38 = vector.load %arg6[%c0, %c0_9, %c0_10] : memref<2x18x64xf32, #tpu.memory_space<vmem>>, vector<2x1x64xf32>
    tpu.vector_store %arg6[%c0, %c0_9, %c0_10], %37 {strides = array<i32>} : memref<2x18x64xf32, #tpu.memory_space<vmem>>, vector<2x1x64xf32>,
    %cst_11 = arith.constant 0.000000e+00 : f32
    %39 = vector.broadcast %cst_11 : f32 to vector<2x1x64xf32>
    %c0_12 = arith.constant 0 : index
    %c17 = arith.constant 17 : index
    %c0_13 = arith.constant 0 : index
    %40 = vector.load %arg6[%c0_12, %c17, %c0_13] : memref<2x18x64xf32, #tpu.memory_space<vmem>>, vector<2x1x64xf32>
    tpu.vector_store %arg6[%c0_12, %c17, %c0_13], %39 {strides = array<i32>} : memref<2x18x64xf32, #tpu.memory_space<vmem>>, vector<2x1x64xf32>,
    %c0_14 = arith.constant 0 : index
    %c0_15 = arith.constant 0 : index
    %c0_16 = arith.constant 0 : index
    %41 = vector.load %arg1[%c0_14, %c0_15, %c0_16] : memref<2x16x64xf32, #tpu.memory_space<vmem>>, vector<2x16x64xf32>
    %c0_17 = arith.constant 0 : index
    %c1 = arith.constant 1 : index
    %c0_18 = arith.constant 0 : index
    %42 = vector.load %arg6[%c0_17, %c1, %c0_18] : memref<2x18x64xf32, #tpu.memory_space<vmem>>, vector<2x16x64xf32>
    tpu.vector_store %arg6[%c0_17, %c1, %c0_18], %41 {strides = array<i32>} : memref<2x18x64xf32, #tpu.memory_space<vmem>>, vector<2x16x64xf32>,
    %cst_19 = arith.constant 0.000000e+00 : f32
    %43 = vector.broadcast %cst_19 : f32 to vector<32x128xf32>
    %c0_20 = arith.constant 0 : index
    %c0_21 = arith.constant 0 : index
    %c0_22 = arith.constant 0 : index
    %44 = vector.load %arg6[%c0_20, %c0_21, %c0_22] : memref<2x18x64xf32, #tpu.memory_space<vmem>>, vector<2x16x64xf32>
    %45 = vector.shape_cast %44 : vector<2x16x64xf32> to vector<32x64xf32>
    %c0_23 = arith.constant 0 : index
    %c0_24 = arith.constant 0 : index
    %c0_25 = arith.constant 0 : index
    %46 = vector.load %arg2[%c0_23, %c0_24, %c0_25] : memref<3x64x128xf32, #tpu.memory_space<vmem>>, vector<1x64x128xf32>
    %47 = vector.shape_cast %46 : vector<1x64x128xf32> to vector<64x128xf32>
    %cst_26 = arith.constant dense<0.000000e+00> : vector<32x128xf32>
    %48 = tpu.matmul %45, %47, %cst_26 {dimension_numbers = #tpu.dot_dimension_numbers<[1], [0], [0], [1], [0, 0, 1, 1], [], []>} : vector<32x64xf32>, vector<64x128xf32>, vector<32x128xf32> -> vector<32x128xf32>
    %49 = arith.addf %43, %48 : vector<32x128xf32>
    %c0_27 = arith.constant 0 : index
    %c1_28 = arith.constant 1 : index
    %c0_29 = arith.constant 0 : index
    %50 = vector.load %arg6[%c0_27, %c1_28, %c0_29] : memref<2x18x64xf32, #tpu.memory_space<vmem>>, vector<2x16x64xf32>
    %51 = vector.shape_cast %50 : vector<2x16x64xf32> to vector<32x64xf32>
    %c1_30 = arith.constant 1 : index
    %c0_31 = arith.constant 0 : index
    %c0_32 = arith.constant 0 : index
    %52 = vector.load %arg2[%c1_30, %c0_31, %c0_32] : memref<3x64x128xf32, #tpu.memory_space<vmem>>, vector<1x64x128xf32>
    %53 = vector.shape_cast %52 : vector<1x64x128xf32> to vector<64x128xf32>
    %cst_33 = arith.constant dense<0.000000e+00> : vector<32x128xf32>
    %54 = tpu.matmul %51, %53, %cst_33 {dimension_numbers = #tpu.dot_dimension_numbers<[1], [0], [0], [1], [0, 0, 1, 1], [], []>} : vector<32x64xf32>, vector<64x128xf32>, vector<32x128xf32> -> vector<32x128xf32>
    %55 = arith.addf %49, %54 : vector<32x128xf32>
    %c0_34 = arith.constant 0 : index
    %c2 = arith.constant 2 : index
    %c0_35 = arith.constant 0 : index
    %56 = vector.load %arg6[%c0_34, %c2, %c0_35] : memref<2x18x64xf32, #tpu.memory_space<vmem>>, vector<2x16x64xf32>
    %57 = vector.shape_cast %56 : vector<2x16x64xf32> to vector<32x64xf32>
    %c2_36 = arith.constant 2 : index
    %c0_37 = arith.constant 0 : index
    %c0_38 = arith.constant 0 : index
    %58 = vector.load %arg2[%c2_36, %c0_37, %c0_38] : memref<3x64x128xf32, #tpu.memory_space<vmem>>, vector<1x64x128xf32>
    %59 = vector.shape_cast %58 : vector<1x64x128xf32> to vector<64x128xf32>
    %cst_39 = arith.constant dense<0.000000e+00> : vector<32x128xf32>
    %60 = tpu.matmul %57, %59, %cst_39 {dimension_numbers = #tpu.dot_dimension_numbers<[1], [0], [0], [1], [0, 0, 1, 1], [], []>} : vector<32x64xf32>, vector<64x128xf32>, vector<32x128xf32> -> vector<32x128xf32>
    %61 = arith.addf %55, %60 : vector<32x128xf32>
    %c0_40 = arith.constant 0 : index
    %c0_41 = arith.constant 0 : index
    %62 = vector.load %arg4[%c0_40, %c0_41] : memref<4x128xf32, #tpu.memory_space<vmem>>, vector<1x128xf32>
    %c1_42 = arith.constant 1 : index
    %c0_43 = arith.constant 0 : index
    %63 = vector.load %arg4[%c1_42, %c0_43] : memref<4x128xf32, #tpu.memory_space<vmem>>, vector<1x128xf32>
    %cst_44 = arith.constant dense<0.000000e+00> : vector<128xf32>
    %64 = vector.multi_reduction <add>, %61, %cst_44 [0] : vector<32x128xf32> to vector<128xf32>
    %65 = vector.shape_cast %64 : vector<128xf32> to vector<1x128xf32>
    %cst_45 = arith.constant dense<0.000000e+00> : vector<1x128xf32>
    %66 = tpu.matmul %65, %36, %cst_45 {dimension_numbers = #tpu.dot_dimension_numbers<[1], [0], [0], [1], [0, 0, 1, 1], [], []>} : vector<1x128xf32>, vector<128x128xf32>, vector<1x128xf32> -> vector<1x128xf32>
    %cst_46 = arith.constant 0.001953125 : f32
    %67 = vector.broadcast %cst_46 : f32 to vector<1x128xf32>
    %68 = arith.mulf %66, %67 : vector<1x128xf32>
    %69 = vector.broadcast %68 : vector<1x128xf32> to vector<32x128xf32>
    %70 = arith.subf %61, %69 : vector<32x128xf32>
    %71 = arith.mulf %70, %70 : vector<32x128xf32>
    %cst_47 = arith.constant dense<0.000000e+00> : vector<128xf32>
    %72 = vector.multi_reduction <add>, %71, %cst_47 [0] : vector<32x128xf32> to vector<128xf32>
    %73 = vector.shape_cast %72 : vector<128xf32> to vector<1x128xf32>
    %cst_48 = arith.constant dense<0.000000e+00> : vector<1x128xf32>
    %74 = tpu.matmul %73, %36, %cst_48 {dimension_numbers = #tpu.dot_dimension_numbers<[1], [0], [0], [1], [0, 0, 1, 1], [], []>} : vector<1x128xf32>, vector<128x128xf32>, vector<1x128xf32> -> vector<1x128xf32>
    %cst_49 = arith.constant 0.001953125 : f32
    %75 = vector.broadcast %cst_49 : f32 to vector<1x128xf32>
    %76 = arith.mulf %74, %75 : vector<1x128xf32>
    %cst_50 = arith.constant 9.99999974E-6 : f32
    %77 = vector.broadcast %cst_50 : f32 to vector<1x128xf32>
    %78 = arith.addf %76, %77 : vector<1x128xf32>
    %79 = math.rsqrt %78 : vector<1x128xf32>
    %80 = arith.mulf %62, %79 : vector<1x128xf32>
    %81 = vector.broadcast %80 : vector<1x128xf32> to vector<32x128xf32>
    %82 = arith.mulf %70, %81 : vector<32x128xf32>
    %83 = vector.broadcast %63 : vector<1x128xf32> to vector<32x128xf32>
    %84 = arith.addf %82, %83 : vector<32x128xf32>
    %cst_51 = arith.constant 0.000000e+00 : f32
    %85 = vector.broadcast %cst_51 : f32 to vector<32x128xf32>
    %86 = arith.maximumf %84, %85 : vector<32x128xf32>
    %cst_52 = arith.constant 0.000000e+00 : f32
    %87 = vector.broadcast %cst_52 : f32 to vector<2x1x128xf32>
    %c0_53 = arith.constant 0 : index
    %c0_54 = arith.constant 0 : index
    %c0_55 = arith.constant 0 : index
    %88 = vector.load %arg7[%c0_53, %c0_54, %c0_55] : memref<2x18x128xf32, #tpu.memory_space<vmem>>, vector<2x1x128xf32>
    tpu.vector_store %arg7[%c0_53, %c0_54, %c0_55], %87 {strides = array<i32>} : memref<2x18x128xf32, #tpu.memory_space<vmem>>, vector<2x1x128xf32>,
    %cst_56 = arith.constant 0.000000e+00 : f32
    %89 = vector.broadcast %cst_56 : f32 to vector<2x1x128xf32>
    %c0_57 = arith.constant 0 : index
    %c17_58 = arith.constant 17 : index
    %c0_59 = arith.constant 0 : index
    %90 = vector.load %arg7[%c0_57, %c17_58, %c0_59] : memref<2x18x128xf32, #tpu.memory_space<vmem>>, vector<2x1x128xf32>
    tpu.vector_store %arg7[%c0_57, %c17_58, %c0_59], %89 {strides = array<i32>} : memref<2x18x128xf32, #tpu.memory_space<vmem>>, vector<2x1x128xf32>,
    %91 = vector.shape_cast %86 : vector<32x128xf32> to vector<2x16x128xf32>
    %c0_60 = arith.constant 0 : index
    %c1_61 = arith.constant 1 : index
    %c0_62 = arith.constant 0 : index
    %92 = vector.load %arg7[%c0_60, %c1_61, %c0_62] : memref<2x18x128xf32, #tpu.memory_space<vmem>>, vector<2x16x128xf32>
    tpu.vector_store %arg7[%c0_60, %c1_61, %c0_62], %91 {strides = array<i32>} : memref<2x18x128xf32, #tpu.memory_space<vmem>>, vector<2x16x128xf32>,
    %cst_63 = arith.constant 0.000000e+00 : f32
    %93 = vector.broadcast %cst_63 : f32 to vector<32x128xf32>
    %c0_64 = arith.constant 0 : index
    %c0_65 = arith.constant 0 : index
    %c0_66 = arith.constant 0 : index
    %94 = vector.load %arg7[%c0_64, %c0_65, %c0_66] : memref<2x18x128xf32, #tpu.memory_space<vmem>>, vector<2x16x128xf32>
    %95 = vector.shape_cast %94 : vector<2x16x128xf32> to vector<32x128xf32>
    %c0_67 = arith.constant 0 : index
    %c0_68 = arith.constant 0 : index
    %c0_69 = arith.constant 0 : index
    %96 = vector.load %arg3[%c0_67, %c0_68, %c0_69] : memref<3x128x128xf32, #tpu.memory_space<vmem>>, vector<1x128x128xf32>
    %97 = vector.shape_cast %96 : vector<1x128x128xf32> to vector<128x128xf32>
    %cst_70 = arith.constant dense<0.000000e+00> : vector<32x128xf32>
    %98 = tpu.matmul %95, %97, %cst_70 {dimension_numbers = #tpu.dot_dimension_numbers<[1], [0], [0], [1], [0, 0, 1, 1], [], []>} : vector<32x128xf32>, vector<128x128xf32>, vector<32x128xf32> -> vector<32x128xf32>
    %99 = arith.addf %93, %98 : vector<32x128xf32>
    %c0_71 = arith.constant 0 : index
    %c1_72 = arith.constant 1 : index
    %c0_73 = arith.constant 0 : index
    %100 = vector.load %arg7[%c0_71, %c1_72, %c0_73] : memref<2x18x128xf32, #tpu.memory_space<vmem>>, vector<2x16x128xf32>
    %101 = vector.shape_cast %100 : vector<2x16x128xf32> to vector<32x128xf32>
    %c1_74 = arith.constant 1 : index
    %c0_75 = arith.constant 0 : index
    %c0_76 = arith.constant 0 : index
    %102 = vector.load %arg3[%c1_74, %c0_75, %c0_76] : memref<3x128x128xf32, #tpu.memory_space<vmem>>, vector<1x128x128xf32>
    %103 = vector.shape_cast %102 : vector<1x128x128xf32> to vector<128x128xf32>
    %cst_77 = arith.constant dense<0.000000e+00> : vector<32x128xf32>
    %104 = tpu.matmul %101, %103, %cst_77 {dimension_numbers = #tpu.dot_dimension_numbers<[1], [0], [0], [1], [0, 0, 1, 1], [], []>} : vector<32x128xf32>, vector<128x128xf32>, vector<32x128xf32> -> vector<32x128xf32>
    %105 = arith.addf %99, %104 : vector<32x128xf32>
    %c0_78 = arith.constant 0 : index
    %c2_79 = arith.constant 2 : index
    %c0_80 = arith.constant 0 : index
    %106 = vector.load %arg7[%c0_78, %c2_79, %c0_80] : memref<2x18x128xf32, #tpu.memory_space<vmem>>, vector<2x16x128xf32>
    %107 = vector.shape_cast %106 : vector<2x16x128xf32> to vector<32x128xf32>
    %c2_81 = arith.constant 2 : index
    %c0_82 = arith.constant 0 : index
    %c0_83 = arith.constant 0 : index
    %108 = vector.load %arg3[%c2_81, %c0_82, %c0_83] : memref<3x128x128xf32, #tpu.memory_space<vmem>>, vector<1x128x128xf32>
    %109 = vector.shape_cast %108 : vector<1x128x128xf32> to vector<128x128xf32>
    %cst_84 = arith.constant dense<0.000000e+00> : vector<32x128xf32>
    %110 = tpu.matmul %107, %109, %cst_84 {dimension_numbers = #tpu.dot_dimension_numbers<[1], [0], [0], [1], [0, 0, 1, 1], [], []>} : vector<32x128xf32>, vector<128x128xf32>, vector<32x128xf32> -> vector<32x128xf32>
    %111 = arith.addf %105, %110 : vector<32x128xf32>
    %c2_85 = arith.constant 2 : index
    %c0_86 = arith.constant 0 : index
    %112 = vector.load %arg4[%c2_85, %c0_86] : memref<4x128xf32, #tpu.memory_space<vmem>>, vector<1x128xf32>
    %c3 = arith.constant 3 : index
    %c0_87 = arith.constant 0 : index
    %113 = vector.load %arg4[%c3, %c0_87] : memref<4x128xf32, #tpu.memory_space<vmem>>, vector<1x128xf32>
    %cst_88 = arith.constant dense<0.000000e+00> : vector<128xf32>
    %114 = vector.multi_reduction <add>, %111, %cst_88 [0] : vector<32x128xf32> to vector<128xf32>
    %115 = vector.shape_cast %114 : vector<128xf32> to vector<1x128xf32>
    %cst_89 = arith.constant dense<0.000000e+00> : vector<1x128xf32>
    %116 = tpu.matmul %115, %36, %cst_89 {dimension_numbers = #tpu.dot_dimension_numbers<[1], [0], [0], [1], [0, 0, 1, 1], [], []>} : vector<1x128xf32>, vector<128x128xf32>, vector<1x128xf32> -> vector<1x128xf32>
    %cst_90 = arith.constant 0.001953125 : f32
    %117 = vector.broadcast %cst_90 : f32 to vector<1x128xf32>
    %118 = arith.mulf %116, %117 : vector<1x128xf32>
    %119 = vector.broadcast %118 : vector<1x128xf32> to vector<32x128xf32>
    %120 = arith.subf %111, %119 : vector<32x128xf32>
    %121 = arith.mulf %120, %120 : vector<32x128xf32>
    %cst_91 = arith.constant dense<0.000000e+00> : vector<128xf32>
    %122 = vector.multi_reduction <add>, %121, %cst_91 [0] : vector<32x128xf32> to vector<128xf32>
    %123 = vector.shape_cast %122 : vector<128xf32> to vector<1x128xf32>
    %cst_92 = arith.constant dense<0.000000e+00> : vector<1x128xf32>
    %124 = tpu.matmul %123, %36, %cst_92 {dimension_numbers = #tpu.dot_dimension_numbers<[1], [0], [0], [1], [0, 0, 1, 1], [], []>} : vector<1x128xf32>, vector<128x128xf32>, vector<1x128xf32> -> vector<1x128xf32>
    %cst_93 = arith.constant 0.001953125 : f32
    %125 = vector.broadcast %cst_93 : f32 to vector<1x128xf32>
    %126 = arith.mulf %124, %125 : vector<1x128xf32>
    %cst_94 = arith.constant 9.99999974E-6 : f32
    %127 = vector.broadcast %cst_94 : f32 to vector<1x128xf32>
    %128 = arith.addf %126, %127 : vector<1x128xf32>
    %129 = math.rsqrt %128 : vector<1x128xf32>
    %130 = arith.mulf %112, %129 : vector<1x128xf32>
    %131 = vector.broadcast %130 : vector<1x128xf32> to vector<32x128xf32>
    %132 = arith.mulf %120, %131 : vector<32x128xf32>
    %133 = vector.broadcast %113 : vector<1x128xf32> to vector<32x128xf32>
    %134 = arith.addf %132, %133 : vector<32x128xf32>
    %cst_95 = arith.constant 0.000000e+00 : f32
    %135 = vector.broadcast %cst_95 : f32 to vector<32x128xf32>
    %136 = arith.maximumf %134, %135 : vector<32x128xf32>
    %c0_96 = arith.constant 0 : index
    %c0_97 = arith.constant 0 : index
    %137 = vector.load %arg5[%c0_96, %c0_97] : memref<32x128xf32, #tpu.memory_space<vmem>>, vector<32x128xf32>
    tpu.vector_store %arg5[%c0_96, %c0_97], %136 {strides = array<i32>} : memref<32x128xf32, #tpu.memory_space<vmem>>, vector<32x128xf32>,
    return
  }
  func.func @transform_0(%arg0: i32) -> (i32, i32, i32) {
    %c0_i32 = arith.constant 0 : i32
    %c0_i32_0 = arith.constant 0 : i32
    %c0_i32_1 = arith.constant 0 : i32
    %c0_i32_2 = arith.constant 0 : i32
    return %c0_i32, %c0_i32_0, %c0_i32_1 : i32, i32, i32
  }
  func.func @transform_1(%arg0: i32) -> (i32, i32, i32) {
    %c0_i32 = arith.constant 0 : i32
    %c0_i32_0 = arith.constant 0 : i32
    %c0_i32_1 = arith.constant 0 : i32
    %c0_i32_2 = arith.constant 0 : i32
    return %c0_i32, %c0_i32_0, %c0_i32_1 : i32, i32, i32
  }
  func.func @transform_2(%arg0: i32) -> (i32, i32, i32) {
    %c0_i32 = arith.constant 0 : i32
    %c0_i32_0 = arith.constant 0 : i32
    %c0_i32_1 = arith.constant 0 : i32
    %c0_i32_2 = arith.constant 0 : i32
    return %c0_i32, %c0_i32_0, %c0_i32_1 : i32, i32, i32
  }
  func.func @transform_3(%arg0: i32) -> (i32, i32) {
    %c0_i32 = arith.constant 0 : i32
    %c0_i32_0 = arith.constant 0 : i32
    %c0_i32_1 = arith.constant 0 : i32
    return %c0_i32, %c0_i32_0 : i32, i32
  }
  func.func @transform_4(%arg0: i32) -> (i32, i32) {
    %c0_i32 = arith.constant 0 : i32
    %c0_i32_0 = arith.constant 0 : i32
    %c0_i32_1 = arith.constant 0 : i32
    return %c0_i32, %c0_i32_0 : i32, i32
  }
}

</mosaic_0001>

<llo_original>
// kernel: tile.23
$region0: #{tile.23}
  #allocation0 [shape = 's32[1]{0}', space=sflag, size = 0x4, scoped, tag = 'scoped memory for tile.23']
  %s0 = inlined_call_operand.vmem [shape: f32[8], index: 0, kind: input, shape index: {}]
  %s1 = inlined_call_operand.vmem [shape: f32[16,8], index: 1, kind: output, shape index: {}]
  // Predicated region
  $region2: #{tile.23} parent=0 // pred_check
    _
  $region3: #{tile.23} parent=0 // pred_check_branch
    %3 = sbr.rel (0) target = $region5
  $region4: #{tile.23} parent=0 // pred_region
    _
  $region5: #{tile.23} parent=0 // pred_fallthru
    _
  %v4 = vld [vmem:[%s0] ss:$0 sm:$0xff]
  %5 = vst [vmem:[%s1] sm:$0xff] %v4
  %s6 = scalar_lea.vmem %s1, 8
  %7 = vst [vmem:[%s6] sm:$0xff] %v4

// kernel: tile.36
$region0: #{tile.36}
  %s0 = inlined_call_operand.vmem [shape: f32[16,8], index: 0, kind: input, shape index: {}]
  %s1 = inlined_call_operand.vmem [shape: f32[1,128], index: 1, kind: output, shape index: {}]
  $region1: #{tile.36} parent=0
    #allocation0 [shape = 'u8[4096]{0}', space=vmem, size = 0x1000, scoped, tag = 'scoped mem for output reshape']
    %v2 = vld [vmem:[%s0] sm:$0x1]
    %vm3 = vcmask 64512
    %4 = vst.msk [vmem:[#allocation0] sm:$0x1] %vm3, %v2
    %s5 = scalar_lea.vmem %s0, 15
    %v6 = vld [vmem:[%s5] sm:$0x1]
    %7 = vrot.lane.b32.xlu0 %v6, 120
    %v8 = vpop.permute.xlu0 %7
    %vm9 = vcmask 1048512
    %10 = vst.msk [vmem:[#allocation0] sm:$0x1] %vm9, %v8
    %s11 = scalar_lea.vmem %s0, 14
    %v12 = vld [vmem:[%s11] sm:$0x1]
    %13 = vrot.lane.b32.xlu0 %v12, 112
    %v14 = vpop.permute.xlu0 %13
    %vm15 = vcmask 982912
    %16 = vst.msk [vmem:[#allocation0] sm:$0x1] %vm15, %v14
    %s17 = scalar_lea.vmem %s0, 13
    %v18 = vld [vmem:[%s17] sm:$0x1]
    %19 = vrot.lane.b32.xlu0 %v18, 104
    %v20 = vpop.permute.xlu0 %19
    %vm21 = vcmask 917312
    %22 = vst.msk [vmem:[#allocation0] sm:$0x1] %vm21, %v20
    %s23 = scalar_lea.vmem %s0, 12
    %v24 = vld [vmem:[%s23] sm:$0x1]
    %25 = vrot.lane.b32.xlu0 %v24, 96
    %v26 = vpop.permute.xlu0 %25
    %vm27 = vcmask 851712
    %28 = vst.msk [vmem:[#allocation0] sm:$0x1] %vm27, %v26
    %s29 = scalar_lea.vmem %s0, 11
    %v30 = vld [vmem:[%s29] sm:$0x1]
    %31 = vrot.lane.b32.xlu0 %v30, 88
    %v32 = vpop.permute.xlu0 %31
    %vm33 = vcmask 786112
    %34 = vst.msk [vmem:[#allocation0] sm:$0x1] %vm33, %v32
    %s35 = scalar_lea.vmem %s0, 10
    %v36 = vld [vmem:[%s35] sm:$0x1]
    %37 = vrot.lane.b32.xlu0 %v36, 80
    %v38 = vpop.permute.xlu0 %37
    %vm39 = vcmask 720512
    %40 = vst.msk [vmem:[#allocation0] sm:$0x1] %vm39, %v38
    %s41 = scalar_lea.vmem %s0, 9
    %v42 = vld [vmem:[%s41] sm:$0x1]
    %43 = vrot.lane.b32.xlu0 %v42, 72
    %v44 = vpop.permute.xlu0 %43
    %vm45 = vcmask 654912
    %46 = vst.msk [vmem:[#allocation0] sm:$0x1] %vm45, %v44
    %s47 = scalar_lea.vmem %s0, 8
    %v48 = vld [vmem:[%s47] sm:$0x1]
    %49 = vrot.lane.b32.xlu0 %v48, 64
    %v50 = vpop.permute.xlu0 %49
    %vm51 = vcmask 589312
    %52 = vst.msk [vmem:[#allocation0] sm:$0x1] %vm51, %v50
    %s53 = scalar_lea.vmem %s0, 7
    %v54 = vld [vmem:[%s53] sm:$0x1]
    %55 = vrot.lane.b32.xlu0 %v54, 56
    %v56 = vpop.permute.xlu0 %55
    %vm57 = vcmask 523712
    %58 = vst.msk [vmem:[#allocation0] sm:$0x1] %vm57, %v56
    %s59 = scalar_lea.vmem %s0, 6
    %v60 = vld [vmem:[%s59] sm:$0x1]
    %61 = vrot.lane.b32.xlu0 %v60, 48
    %v62 = vpop.permute.xlu0 %61
    %vm63 = vcmask 458112
    %64 = vst.msk [vmem:[#allocation0] sm:$0x1] %vm63, %v62
    %s65 = scalar_lea.vmem %s0, 5
    %v66 = vld [vmem:[%s65] sm:$0x1]
    %67 = vrot.lane.b32.xlu0 %v66, 40
    %v68 = vpop.permute.xlu0 %67
    %vm69 = vcmask 392512
    %70 = vst.msk [vmem:[#allocation0] sm:$0x1] %vm69, %v68
    %s71 = scalar_lea.vmem %s0, 4
    %v72 = vld [vmem:[%s71] sm:$0x1]
    %73 = vrot.lane.b32.xlu0 %v72, 32
    %v74 = vpop.permute.xlu0 %73
    %vm75 = vcmask 326912
    %76 = vst.msk [vmem:[#allocation0] sm:$0x1] %vm75, %v74
    %s77 = scalar_lea.vmem %s0, 3
    %v78 = vld [vmem:[%s77] sm:$0x1]
    %79 = vrot.lane.b32.xlu0 %v78, 24
    %v80 = vpop.permute.xlu0 %79
    %vm81 = vcmask 261312
    %82 = vst.msk [vmem:[#allocation0] sm:$0x1] %vm81, %v80
    %s83 = scalar_lea.vmem %s0, 2
    %v84 = vld [vmem:[%s83] sm:$0x1]
    %85 = vrot.lane.b32.xlu0 %v84, 16
    %v86 = vpop.permute.xlu0 %85
    %vm87 = vcmask 195712
    %88 = vst.msk [vmem:[#allocation0] sm:$0x1] %vm87, %v86
    %s89 = scalar_lea.vmem %s0, 1
    %v90 = vld [vmem:[%s89] sm:$0x1]
    %91 = vrot.lane.b32.xlu0 %v90, 8
    %v92 = vpop.permute.xlu0 %91
    %vm93 = vcmask 130112
    %94 = vst.msk [vmem:[#allocation0] sm:$0x1] %vm93, %v92
    %s96 = ssub.s32 2, 1
    %v97 = vld [vmem:[#allocation0] sm:%s96]
    %s99 = ssub.s32 2, 1
    %100 = vst [vmem:[%s1] sm:%s99] %v97

// kernel: conv2d_block_forward.1
$region0: #{conv2d_block_forward.1}
  #allocation0 [shape = 'u32[]', space=smem, size = 0x4, offset = 0x4, fixed_abs, tag = 'smem constant byte address 0x4 - core index']
  #allocation1 [shape = 'u32[72,128]{1,0:T(1,128)}', space=vmem, size = 0x9000, scoped, tag = 'internal scratch']
  #allocation2 [shape = 'f32[2,18,64]{2,1,0:T(8,128)}', space=vmem, size = 0x6000, scoped, tag = 'scratch operand']
  #allocation3 [shape = 'f32[2,18,128]{2,1,0:T(8,128)}', space=vmem, size = 0x6000, scoped, tag = 'scratch operand']
  %s0 = inlined_call_operand.vmem [shape: f32[2,16,64], index: 0, kind: input, shape index: {}]
  %s1 = inlined_call_operand.vmem [shape: f32[3,64,128], index: 1, kind: input, shape index: {}]
  %s2 = inlined_call_operand.vmem [shape: f32[3,128,128], index: 2, kind: input, shape index: {}]
  %s3 = inlined_call_operand.vmem [shape: f32[4,128], index: 3, kind: input, shape index: {}]
  %s4 = inlined_call_operand.vmem [shape: f32[32,128], index: 4, kind: output, shape index: {}]
  %s5 = sld [smem:[#allocation0]]
  $region26: #{conv2d_block_forward.1} parent=0
    _
  %s7 = ssub.s32 1, %s5
  %s8 = scalar_select 0, %s7, %s5
  // Predicated region
  $region2: #{conv2d_block_forward.1} parent=0 // pred_check
    _
  $region3: #{conv2d_block_forward.1} parent=0 // pred_check_branch
    %10 = sbr.rel (0) target = $region5
  $region4: #{conv2d_block_forward.1} parent=0 // pred_region
    _
  $region5: #{conv2d_block_forward.1} parent=0 // pred_fallthru
    _
  // Predicated region
  $region6: #{conv2d_block_forward.1} parent=0 // pred_check
    _
  $region7: #{conv2d_block_forward.1} parent=0 // pred_check_branch
    %12 = sbr.rel (0) target = $region9
  $region8: #{conv2d_block_forward.1} parent=0 // pred_region
    _
  $region9: #{conv2d_block_forward.1} parent=0 // pred_fallthru
    _
  // Predicated region
  $region10: #{conv2d_block_forward.1} parent=0 // pred_check
    _
  $region11: #{conv2d_block_forward.1} parent=0 // pred_check_branch
    %14 = sbr.rel (0) target = $region13
  $region12: #{conv2d_block_forward.1} parent=0 // pred_region
    _
  $region13: #{conv2d_block_forward.1} parent=0 // pred_fallthru
    _
  // Predicated region
  $region14: #{conv2d_block_forward.1} parent=0 // pred_check
    _
  $region15: #{conv2d_block_forward.1} parent=0 // pred_check_branch
    %16 = sbr.rel (0) target = $region17
  $region16: #{conv2d_block_forward.1} parent=0 // pred_region
    _
  $region17: #{conv2d_block_forward.1} parent=0 // pred_fallthru
    _
  %v17 = vlaneseq
  %v18 = vshrl.u32 %v17, 7
  %v19 = vadd.s32 %v18, 8
  %v20 = vadd.s32 %v18, 16
  %v21 = vadd.s32 %v18, 24
  %v22 = vadd.s32 %v18, 32
  %v23 = vadd.s32 %v18, 40
  %v24 = vadd.s32 %v18, 48
  %v25 = vadd.s32 %v18, 56
  %v26 = vadd.s32 %v18, 64
  %v27 = vadd.s32 %v18, 72
  %v28 = vadd.s32 %v18, 80
  %v29 = vadd.s32 %v18, 88
  %v30 = vadd.s32 %v18, 96
  %v31 = vadd.s32 %v18, 104
  %v32 = vadd.s32 %v18, 112
  %v33 = vadd.s32 %v18, 120
  %v34 = vlaneseq
  %v35 = vand.u32 %v34, 127
  %vm36 = vcmp.lt.s32.totalorder %v18, 0
  %v37 = vsub.s32 0, %v18
  %v38 = vsel %vm36, %v37, %v18
  %v39 = vshrl.u32 %v38, 3
  %v40 = vand.u32 %v38, 7
  %v41 = vsub.s32 0, %v40
  %v42 = vsel %vm36, %v41, %v40
  %vm43 = vcmp.lt.s32.totalorder %v19, 0
  %v44 = vsub.s32 0, %v19
  %v45 = vsel %vm43, %v44, %v19
  %v46 = vshrl.u32 %v45, 3
  %v47 = vand.u32 %v45, 7
  %v48 = vsub.s32 0, %v47
  %v49 = vsel %vm43, %v48, %v47
  %vm50 = vcmp.lt.s32.totalorder %v20, 0
  %v51 = vsub.s32 0, %v20
  %v52 = vsel %vm50, %v51, %v20
  %v53 = vshrl.u32 %v52, 3
  %v54 = vand.u32 %v52, 7
  %v55 = vsub.s32 0, %v54
  %v56 = vsel %vm50, %v55, %v54
  %vm57 = vcmp.lt.s32.totalorder %v21, 0
  %v58 = vsub.s32 0, %v21
  %v59 = vsel %vm57, %v58, %v21
  %v60 = vshrl.u32 %v59, 3
  %v61 = vand.u32 %v59, 7
  %v62 = vsub.s32 0, %v61
  %v63 = vsel %vm57, %v62, %v61
  %vm64 = vcmp.lt.s32.totalorder %v22, 0
  %v65 = vsub.s32 0, %v22
  %v66 = vsel %vm64, %v65, %v22
  %v67 = vshrl.u32 %v66, 3
  %v68 = vand.u32 %v66, 7
  %v69 = vsub.s32 0, %v68
  %v70 = vsel %vm64, %v69, %v68
  %vm71 = vcmp.lt.s32.totalorder %v23, 0
  %v72 = vsub.s32 0, %v23
  %v73 = vsel %vm71, %v72, %v23
  %v74 = vshrl.u32 %v73, 3
  %v75 = vand.u32 %v73, 7
  %v76 = vsub.s32 0, %v75
  %v77 = vsel %vm71, %v76, %v75
  %vm78 = vcmp.lt.s32.totalorder %v24, 0
  %v79 = vsub.s32 0, %v24
  %v80 = vsel %vm78, %v79, %v24
  %v81 = vshrl.u32 %v80, 3
  %v82 = vand.u32 %v80, 7
  %v83 = vsub.s32 0, %v82
  %v84 = vsel %vm78, %v83, %v82
  %vm85 = vcmp.lt.s32.totalorder %v25, 0
  %v86 = vsub.s32 0, %v25
  %v87 = vsel %vm85, %v86, %v25
  %v88 = vshrl.u32 %v87, 3
  %v89 = vand.u32 %v87, 7
  %v90 = vsub.s32 0, %v89
  %v91 = vsel %vm85, %v90, %v89
  %vm92 = vcmp.lt.s32.totalorder %v26, 0
  %v93 = vsub.s32 0, %v26
  %v94 = vsel %vm92, %v93, %v26
  %v95 = vshrl.u32 %v94, 3
  %v96 = vand.u32 %v94, 7
  %v97 = vsub.s32 0, %v96
  %v98 = vsel %vm92, %v97, %v96
  %vm99 = vcmp.lt.s32.totalorder %v27, 0
  %v100 = vsub.s32 0, %v27
  %v101 = vsel %vm99, %v100, %v27
  %v102 = vshrl.u32 %v101, 3
  %v103 = vand.u32 %v101, 7
  %v104 = vsub.s32 0, %v103
  %v105 = vsel %vm99, %v104, %v103
  %vm106 = vcmp.lt.s32.totalorder %v28, 0
  %v107 = vsub.s32 0, %v28
  %v108 = vsel %vm106, %v107, %v28
  %v109 = vshrl.u32 %v108, 3
  %v110 = vand.u32 %v108, 7
  %v111 = vsub.s32 0, %v110
  %v112 = vsel %vm106, %v111, %v110
  %vm113 = vcmp.lt.s32.totalorder %v29, 0
  %v114 = vsub.s32 0, %v29
  %v115 = vsel %vm113, %v114, %v29
  %v116 = vshrl.u32 %v115, 3
  %v117 = vand.u32 %v115, 7
  %v118 = vsub.s32 0, %v117
  %v119 = vsel %vm113, %v118, %v117
  %vm120 = vcmp.lt.s32.totalorder %v30, 0
  %v121 = vsub.s32 0, %v30
  %v122 = vsel %vm120, %v121, %v30
  %v123 = vshrl.u32 %v122, 3
  %v124 = vand.u32 %v122, 7
  %v125 = vsub.s32 0, %v124
  %v126 = vsel %vm120, %v125, %v124
  %vm127 = vcmp.lt.s32.totalorder %v31, 0
  %v128 = vsub.s32 0, %v31
  %v129 = vsel %vm127, %v128, %v31
  %v130 = vshrl.u32 %v129, 3
  %v131 = vand.u32 %v129, 7
  %v132 = vsub.s32 0, %v131
  %v133 = vsel %vm127, %v132, %v131
  %vm134 = vcmp.lt.s32.totalorder %v32, 0
  %v135 = vsub.s32 0, %v32
  %v136 = vsel %vm134, %v135, %v32
  %v137 = vshrl.u32 %v136, 3
  %v138 = vand.u32 %v136, 7
  %v139 = vsub.s32 0, %v138
  %v140 = vsel %vm134, %v139, %v138
  %vm141 = vcmp.lt.s32.totalorder %v33, 0
  %v142 = vsub.s32 0, %v33
  %v143 = vsel %vm141, %v142, %v33
  %v144 = vshrl.u32 %v143, 3
  %v145 = vand.u32 %v143, 7
  %v146 = vsub.s32 0, %v145
  %v147 = vsel %vm141, %v146, %v145
  %vm148 = vcmp.ne.s32.totalorder %v42, 0
  %vm149 = vcmp.ne.s32.totalorder %v49, 0
  %vm150 = vcmp.ne.s32.totalorder %v56, 0
  %vm151 = vcmp.ne.s32.totalorder %v63, 0
  %vm152 = vcmp.ne.s32.totalorder %v70, 0
  %vm153 = vcmp.ne.s32.totalorder %v77, 0
  %vm154 = vcmp.ne.s32.totalorder %v84, 0
  %vm155 = vcmp.ne.s32.totalorder %v91, 0
  %vm156 = vcmp.ne.s32.totalorder %v98, 0
  %vm157 = vcmp.ne.s32.totalorder %v105, 0
  %vm158 = vcmp.ne.s32.totalorder %v112, 0
  %vm159 = vcmp.ne.s32.totalorder %v119, 0
  %vm160 = vcmp.ne.s32.totalorder %v126, 0
  %vm161 = vcmp.ne.s32.totalorder %v133, 0
  %vm162 = vcmp.ne.s32.totalorder %v140, 0
  %vm163 = vcmp.ne.s32.totalorder %v147, 0
  %vm164 = vcmp.lt.s32.totalorder %v42, 0
  %vm165 = vcmp.lt.s32.totalorder %v49, 0
  %vm166 = vcmp.lt.s32.totalorder %v56, 0
  %vm167 = vcmp.lt.s32.totalorder %v63, 0
  %vm168 = vcmp.lt.s32.totalorder %v70, 0
  %vm169 = vcmp.lt.s32.totalorder %v77, 0
  %vm170 = vcmp.lt.s32.totalorder %v84, 0
  %vm171 = vcmp.lt.s32.totalorder %v91, 0
  %vm172 = vcmp.lt.s32.totalorder %v98, 0
  %vm173 = vcmp.lt.s32.totalorder %v105, 0
  %vm174 = vcmp.lt.s32.totalorder %v112, 0
  %vm175 = vcmp.lt.s32.totalorder %v119, 0
  %vm176 = vcmp.lt.s32.totalorder %v126, 0
  %vm177 = vcmp.lt.s32.totalorder %v133, 0
  %vm178 = vcmp.lt.s32.totalorder %v140, 0
  %vm179 = vcmp.lt.s32.totalorder %v147, 0
  %vm180 = vmand %vm164, %vm148
  %vm181 = vmand %vm165, %vm149
  %vm182 = vmand %vm166, %vm150
  %vm183 = vmand %vm167, %vm151
  %vm184 = vmand %vm168, %vm152
  %vm185 = vmand %vm169, %vm153
  %vm186 = vmand %vm170, %vm154
  %vm187 = vmand %vm171, %vm155
  %vm188 = vmand %vm172, %vm156
  %vm189 = vmand %vm173, %vm157
  %vm190 = vmand %vm174, %vm158
  %vm191 = vmand %vm175, %vm159
  %vm192 = vmand %vm176, %vm160
  %vm193 = vmand %vm177, %vm161
  %vm194 = vmand %vm178, %vm162
  %vm195 = vmand %vm179, %vm163
  %v196 = vadd.s32 %v42, 8
  %v197 = vadd.s32 %v49, 8
  %v198 = vadd.s32 %v56, 8
  %v199 = vadd.s32 %v63, 8
  %v200 = vadd.s32 %v70, 8
  %v201 = vadd.s32 %v77, 8
  %v202 = vadd.s32 %v84, 8
  %v203 = vadd.s32 %v91, 8
  %v204 = vadd.s32 %v98, 8
  %v205 = vadd.s32 %v105, 8
  %v206 = vadd.s32 %v112, 8
  %v207 = vadd.s32 %v119, 8
  %v208 = vadd.s32 %v126, 8
  %v209 = vadd.s32 %v133, 8
  %v210 = vadd.s32 %v140, 8
  %v211 = vadd.s32 %v147, 8
  %v212 = vsel %vm180, %v196, %v42
  %v213 = vsel %vm181, %v197, %v49
  %v214 = vsel %vm182, %v198, %v56
  %v215 = vsel %vm183, %v199, %v63
  %v216 = vsel %vm184, %v200, %v70
  %v217 = vsel %vm185, %v201, %v77
  %v218 = vsel %vm186, %v202, %v84
  %v219 = vsel %vm187, %v203, %v91
  %v220 = vsel %vm188, %v204, %v98
  %v221 = vsel %vm189, %v205, %v105
  %v222 = vsel %vm190, %v206, %v112
  %v223 = vsel %vm191, %v207, %v119
  %v224 = vsel %vm192, %v208, %v126
  %v225 = vsel %vm193, %v209, %v133
  %v226 = vsel %vm194, %v210, %v140
  %v227 = vsel %vm195, %v211, %v147
  %vm228 = vcmp.lt.s32.totalorder %v35, 0
  %v229 = vsub.s32 0, %v35
  %v230 = vsel %vm228, %v229, %v35
  %v231 = vshrl.u32 %v230, 3
  %v232 = vand.u32 %v230, 7
  %v233 = vsub.s32 0, %v232
  %v234 = vsel %vm228, %v233, %v232
  %vm235 = vcmp.ne.s32.totalorder %v234, 0
  %vm236 = vcmp.lt.s32.totalorder %v234, 0
  %vm237 = vmand %vm236, %vm235
  %v238 = vadd.s32 %v234, 8
  %v239 = vsel %vm237, %v238, %v234
  %vm240 = vcmp.eq.s32.totalorder %v212, %v239
  %vm241 = vcmp.eq.s32.totalorder %v213, %v239
  %vm242 = vcmp.eq.s32.totalorder %v214, %v239
  %vm243 = vcmp.eq.s32.totalorder %v215, %v239
  %vm244 = vcmp.eq.s32.totalorder %v216, %v239
  %vm245 = vcmp.eq.s32.totalorder %v217, %v239
  %vm246 = vcmp.eq.s32.totalorder %v218, %v239
  %vm247 = vcmp.eq.s32.totalorder %v219, %v239
  %vm248 = vcmp.eq.s32.totalorder %v220, %v239
  %vm249 = vcmp.eq.s32.totalorder %v221, %v239
  %vm250 = vcmp.eq.s32.totalorder %v222, %v239
  %vm251 = vcmp.eq.s32.totalorder %v223, %v239
  %vm252 = vcmp.eq.s32.totalorder %v224, %v239
  %vm253 = vcmp.eq.s32.totalorder %v225, %v239
  %vm254 = vcmp.eq.s32.totalorder %v226, %v239
  %vm255 = vcmp.eq.s32.totalorder %v227, %v239
  %v256 = vsel %vm240, 1, 0
  %v257 = vsel %vm241, 1, 0
  %v258 = vsel %vm242, 1, 0
  %v259 = vsel %vm243, 1, 0
  %v260 = vsel %vm244, 1, 0
  %v261 = vsel %vm245, 1, 0
  %v262 = vsel %vm246, 1, 0
  %v263 = vsel %vm247, 1, 0
  %v264 = vsel %vm248, 1, 0
  %v265 = vsel %vm249, 1, 0
  %v266 = vsel %vm250, 1, 0
  %v267 = vsel %vm251, 1, 0
  %v268 = vsel %vm252, 1, 0
  %v269 = vsel %vm253, 1, 0
  %v270 = vsel %vm254, 1, 0
  %v271 = vsel %vm255, 1, 0
  %v272 = vcvt.s32.f32 %v256
  %v273 = vcvt.s32.f32 %v257
  %v274 = vcvt.s32.f32 %v258
  %v275 = vcvt.s32.f32 %v259
  %v276 = vcvt.s32.f32 %v260
  %v277 = vcvt.s32.f32 %v261
  %v278 = vcvt.s32.f32 %v262
  %v279 = vcvt.s32.f32 %v263
  %v280 = vcvt.s32.f32 %v264
  %v281 = vcvt.s32.f32 %v265
  %v282 = vcvt.s32.f32 %v266
  %v283 = vcvt.s32.f32 %v267
  %v284 = vcvt.s32.f32 %v268
  %v285 = vcvt.s32.f32 %v269
  %v286 = vcvt.s32.f32 %v270
  %v287 = vcvt.s32.f32 %v271
  %vm288 = vcmask 516096
  %289 = vst.msk [vmem:[#allocation2] sm:$0x1] %vm288, 0.0
  %290 = vst.msk [vmem:[#allocation2 + $0x18] sm:$0x1] %vm288, 0.0
  %291 = vst.msk [vmem:[#allocation2 + $0x11] sm:$0x1] %vm288, 0.0
  %292 = vst.msk [vmem:[#allocation2 + $0x29] sm:$0x1] %vm288, 0.0
  %v293 = vld [vmem:[%s0] sm:$0xff]
  %v294 = vld [vmem:[%s0 + $0x8] sm:$0xff]
  %v295 = vld [vmem:[%s0 + $0x10] sm:$0xff]
  %v296 = vld [vmem:[%s0 + $0x18] sm:$0xff]
  %vm297 = vcmask 523264
  %298 = vst.msk [vmem:[#allocation2 + $0x1] sm:$0xff] %vm297, %v293
  %299 = vst.msk [vmem:[#allocation2 + $0x9] sm:$0xff] %vm297, %v294
  %300 = vst.msk [vmem:[#allocation2 + $0x19] sm:$0xff] %vm297, %v295
  %301 = vst.msk [vmem:[#allocation2 + $0x21] sm:$0xff] %vm297, %v296
  %v302 = vld [vmem:[#allocation2] sm:$0xff]
  %v303 = vld [vmem:[#allocation2 + $0x8] sm:$0xff]
  %v304 = vld [vmem:[#allocation2 + $0x18] sm:$0xff]
  %v305 = vld [vmem:[#allocation2 + $0x20] sm:$0xff]
  %v306 = vld [vmem:[%s1] sm:$0xff]
  %v307 = vld [vmem:[%s1 + $0x8] sm:$0xff]
  %v308 = vld [vmem:[%s1 + $0x10] sm:$0xff]
  %v309 = vld [vmem:[%s1 + $0x18] sm:$0xff]
  %v310 = vld [vmem:[%s1 + $0x20] sm:$0xff]
  %v311 = vld [vmem:[%s1 + $0x28] sm:$0xff]
  %v312 = vld [vmem:[%s1 + $0x30] sm:$0xff]
  %v313 = vld [vmem:[%s1 + $0x38] sm:$0xff]
  %v314 = vld [vmem:[#allocation2 + $0x1] sm:$0xff]
  %v315 = vld [vmem:[#allocation2 + $0x9] sm:$0xff]
  %v316 = vld [vmem:[#allocation2 + $0x19] sm:$0xff]
  %v317 = vld [vmem:[#allocation2 + $0x21] sm:$0xff]
  %s318 = scalar_lea.vmem %s1, 64
  %v319 = vld [vmem:[%s318] sm:$0xff]
  %v320 = vld [vmem:[%s318 + $0x8] sm:$0xff]
  %v321 = vld [vmem:[%s318 + $0x10] sm:$0xff]
  %v322 = vld [vmem:[%s318 + $0x18] sm:$0xff]
  %v323 = vld [vmem:[%s318 + $0x20] sm:$0xff]
  %v324 = vld [vmem:[%s318 + $0x28] sm:$0xff]
  %v325 = vld [vmem:[%s318 + $0x30] sm:$0xff]
  %v326 = vld [vmem:[%s318 + $0x38] sm:$0xff]
  %v328 = vsel %vm297, %v314, 0
  %v331 = vsel %vm297, %v315, 0
  %v334 = vsel %vm297, %v316, 0
  %v337 = vsel %vm297, %v317, 0
  %339 = vmatpush.msra.mxu0 0.0
  %340 = vmatpush.msra.mxu0 0.0
  %341 = vmatpush.msra.mxu0 0.0
  %342 = vmatpush.msra.mxu0 0.0
  %343 = vmatpush.msra.mxu0 0.0
  %344 = vmatpush.msra.mxu0 0.0
  %345 = vmatpush.msra.mxu0 0.0
  %346 = vmatpush.msra.mxu0 0.0
  %347 = vmatpush.msra.mxu0 %v326
  %348 = vmatpush.msra.mxu0 %v325
  %349 = vmatpush.msra.mxu0 %v324
  %350 = vmatpush.msra.mxu0 %v323
  %351 = vmatpush.msra.mxu0 %v322
  %352 = vmatpush.msra.mxu0 %v321
  %353 = vmatpush.msra.mxu0 %v320
  %354 = vmatpush.msra.mxu0 %v319
  %355 = vmatmul.f32.gmra.mxu0 %v328
  %v356 = vpop.f32.mrf.mxu0
  %v357 = vadd.f32 0.0, %v356
  %358 = vmatmul.f32.gmra.mxu0 %v331
  %v359 = vpop.f32.mrf.mxu0
  %v360 = vadd.f32 0.0, %v359
  %361 = vmatmul.f32.gmra.mxu0 %v334
  %v362 = vpop.f32.mrf.mxu0
  %v363 = vadd.f32 0.0, %v362
  %364 = vmatmul.f32.gmra.mxu0 %v337
  %v365 = vpop.f32.mrf.mxu0
  %v366 = vadd.f32 0.0, %v365
  %367 = vdwg.mxu0
  %v369 = vsel %vm297, %v302, 0
  %v372 = vsel %vm297, %v303, 0
  %v375 = vsel %vm297, %v304, 0
  %v378 = vsel %vm297, %v305, 0
  %380 = vmatpush.msra.mxu0 0.0
  %381 = vmatpush.msra.mxu0 0.0
  %382 = vmatpush.msra.mxu0 0.0
  %383 = vmatpush.msra.mxu0 0.0
  %384 = vmatpush.msra.mxu0 0.0
  %385 = vmatpush.msra.mxu0 0.0
  %386 = vmatpush.msra.mxu0 0.0
  %387 = vmatpush.msra.mxu0 0.0
  %388 = vmatpush.msra.mxu0 %v313
  %389 = vmatpush.msra.mxu0 %v312
  %390 = vmatpush.msra.mxu0 %v311
  %391 = vmatpush.msra.mxu0 %v310
  %392 = vmatpush.msra.mxu0 %v309
  %393 = vmatpush.msra.mxu0 %v308
  %394 = vmatpush.msra.mxu0 %v307
  %395 = vmatpush.msra.mxu0 %v306
  %396 = vmatmul.f32.gmra.mxu0 %v369
  %v397 = vpop.f32.mrf.mxu0
  %v398 = vadd.f32 %v357, %v397
  %399 = vmatmul.f32.gmra.mxu0 %v372
  %v400 = vpop.f32.mrf.mxu0
  %v401 = vadd.f32 %v360, %v400
  %402 = vmatmul.f32.gmra.mxu0 %v375
  %v403 = vpop.f32.mrf.mxu0
  %v404 = vadd.f32 %v363, %v403
  %405 = vmatmul.f32.gmra.mxu0 %v378
  %v406 = vpop.f32.mrf.mxu0
  %v407 = vadd.f32 %v366, %v406
  %408 = vdwg.mxu0
  %v409 = vld [vmem:[#allocation2 + $0x2] sm:$0xff]
  %v410 = vld [vmem:[#allocation2 + $0xa] sm:$0xff]
  %v411 = vld [vmem:[#allocation2 + $0x1a] sm:$0xff]
  %v412 = vld [vmem:[#allocation2 + $0x22] sm:$0xff]
  %s413 = scalar_lea.vmem %s1, 128
  %v414 = vld [vmem:[%s413] sm:$0xff]
  %v415 = vld [vmem:[%s413 + $0x8] sm:$0xff]
  %v416 = vld [vmem:[%s413 + $0x10] sm:$0xff]
  %v417 = vld [vmem:[%s413 + $0x18] sm:$0xff]
  %v418 = vld [vmem:[%s413 + $0x20] sm:$0xff]
  %v419 = vld [vmem:[%s413 + $0x28] sm:$0xff]
  %v420 = vld [vmem:[%s413 + $0x30] sm:$0xff]
  %v421 = vld [vmem:[%s413 + $0x38] sm:$0xff]
  %v423 = vsel %vm297, %v409, 0
  %v426 = vsel %vm297, %v410, 0
  %v429 = vsel %vm297, %v411, 0
  %v432 = vsel %vm297, %v412, 0
  %434 = vmatpush.msra.mxu0 0.0
  %435 = vmatpush.msra.mxu0 0.0
  %436 = vmatpush.msra.mxu0 0.0
  %437 = vmatpush.msra.mxu0 0.0
  %438 = vmatpush.msra.mxu0 0.0
  %439 = vmatpush.msra.mxu0 0.0
  %440 = vmatpush.msra.mxu0 0.0
  %441 = vmatpush.msra.mxu0 0.0
  %442 = vmatpush.msra.mxu0 %v421
  %443 = vmatpush.msra.mxu0 %v420
  %444 = vmatpush.msra.mxu0 %v419
  %445 = vmatpush.msra.mxu0 %v418
  %446 = vmatpush.msra.mxu0 %v417
  %447 = vmatpush.msra.mxu0 %v416
  %448 = vmatpush.msra.mxu0 %v415
  %449 = vmatpush.msra.mxu0 %v414
  %450 = vmatmul.f32.gmra.mxu0 %v423
  %v451 = vpop.f32.mrf.mxu0
  %v452 = vadd.f32 0.0, %v451
  %453 = vmatmul.f32.gmra.mxu0 %v426
  %v454 = vpop.f32.mrf.mxu0
  %v455 = vadd.f32 0.0, %v454
  %456 = vmatmul.f32.gmra.mxu0 %v429
  %v457 = vpop.f32.mrf.mxu0
  %v458 = vadd.f32 0.0, %v457
  %459 = vmatmul.f32.gmra.mxu0 %v432
  %v460 = vpop.f32.mrf.mxu0
  %v461 = vadd.f32 0.0, %v460
  %462 = vdwg.mxu0
  %v463 = vadd.f32 %v398, %v452
  %v464 = vadd.f32 %v401, %v455
  %v465 = vadd.f32 %v404, %v458
  %v466 = vadd.f32 %v407, %v461
  %v467 = vld [vmem:[%s3] sm:$0x1]
  %v468 = vld [vmem:[%s3 + $0x1] sm:$0x1]
  %v469 = vadd.f32 %v463, %v464
  %v470 = vadd.f32 %v469, %v465
  %v471 = vadd.f32 %v470, %v466
  %v472 = vrot.slane %v471, 4
  %v473 = vadd.f32 %v471, %v472
  %v474 = vrot.slane %v473, 2
  %v475 = vadd.f32 %v473, %v474
  %v476 = vrot.slane %v475, 1
  %v477 = vadd.f32 %v475, %v476
  %478 = vmatpush.msra.mxu0 %v287
  %479 = vmatpush.msra.mxu0 %v286
  %480 = vmatpush.msra.mxu0 %v285
  %481 = vmatpush.msra.mxu0 %v284
  %482 = vmatpush.msra.mxu0 %v283
  %483 = vmatpush.msra.mxu0 %v282
  %484 = vmatpush.msra.mxu0 %v281
  %485 = vmatpush.msra.mxu0 %v280
  %486 = vmatpush.msra.mxu0 %v279
  %487 = vmatpush.msra.mxu0 %v278
  %488 = vmatpush.msra.mxu0 %v277
  %489 = vmatpush.msra.mxu0 %v276
  %490 = vmatpush.msra.mxu0 %v275
  %491 = vmatpush.msra.mxu0 %v274
  %492 = vmatpush.msra.mxu0 %v273
  %493 = vmatpush.msra.mxu0 %v272
  %494 = vmatmul.f32.gmra.mxu0 %v477
  %v495 = vpop.f32.mrf.mxu0
  %v496 = vadd.f32 0.0, %v495
  %497 = vdwg.mxu0
  %v498 = vmul.f32 %v496, 0.001953125
  %v499 = vperm.slane %v498, 0
  %v500 = vsub.f32 %v463, %v499
  %v501 = vsub.f32 %v464, %v499
  %v502 = vsub.f32 %v465, %v499
  %v503 = vsub.f32 %v466, %v499
  %v504 = vmul.f32 %v500, %v500
  %v505 = vmul.f32 %v501, %v501
  %v506 = vmul.f32 %v502, %v502
  %v507 = vmul.f32 %v503, %v503
  %v508 = vadd.f32 %v504, %v505
  %v509 = vadd.f32 %v508, %v506
  %v510 = vadd.f32 %v509, %v507
  %v511 = vrot.slane %v510, 4
  %v512 = vadd.f32 %v510, %v511
  %v513 = vrot.slane %v512, 2
  %v514 = vadd.f32 %v512, %v513
  %v515 = vrot.slane %v514, 1
  %v516 = vadd.f32 %v514, %v515
  %517 = vmatpush.msra.mxu0 %v287
  %518 = vmatpush.msra.mxu0 %v286
  %519 = vmatpush.msra.mxu0 %v285
  %520 = vmatpush.msra.mxu0 %v284
  %521 = vmatpush.msra.mxu0 %v283
  %522 = vmatpush.msra.mxu0 %v282
  %523 = vmatpush.msra.mxu0 %v281
  %524 = vmatpush.msra.mxu0 %v280
  %525 = vmatpush.msra.mxu0 %v279
  %526 = vmatpush.msra.mxu0 %v278
  %527 = vmatpush.msra.mxu0 %v277
  %528 = vmatpush.msra.mxu0 %v276
  %529 = vmatpush.msra.mxu0 %v275
  %530 = vmatpush.msra.mxu0 %v274
  %531 = vmatpush.msra.mxu0 %v273
  %532 = vmatpush.msra.mxu0 %v272
  %533 = vmatmul.f32.gmra.mxu0 %v516
  %v534 = vpop.f32.mrf.mxu0
  %v535 = vadd.f32 0.0, %v534
  %536 = vdwg.mxu0
  %v537 = vmul.f32 %v535, 0.001953125
  %v538 = vadd.f32 %v537, 1e-05
  %v539 = vrsqrt.pop %v538
  %v540 = vmul.f32 %v539, %v538
  %v541 = vmul.f32 %v540, %v539
  %v542 = vmul.f32 0.5, %v541
  %v543 = vsub.f32 1.5, %v542
  %v544 = vmul.f32 %v539, %v543
  %vm545 = vweird.f32 %v538
  %vm546 = vweird.f32 %v539
  %vm547 = vmor %vm545, %vm546
  %v548 = vsel %vm547, %v539, %v544
  %v549 = vmul.f32 %v467, %v548
  %v550 = vperm.slane %v549, 0
  %v551 = vmul.f32 %v500, %v550
  %v552 = vmul.f32 %v501, %v550
  %v553 = vmul.f32 %v502, %v550
  %v554 = vmul.f32 %v503, %v550
  %v555 = vperm.slane %v468, 0
  %v556 = vadd.f32 %v551, %v555
  %v557 = vadd.f32 %v552, %v555
  %v558 = vadd.f32 %v553, %v555
  %v559 = vadd.f32 %v554, %v555
  %v560 = vmax.f32 %v556, 0.0
  %v561 = vmax.f32 %v557, 0.0
  %v562 = vmax.f32 %v558, 0.0
  %v563 = vmax.f32 %v559, 0.0
  %564 = vst [vmem:[#allocation3] sm:$0x1] 0.0
  %565 = vst [vmem:[#allocation3 + $0x18] sm:$0x1] 0.0
  %566 = vst [vmem:[#allocation3 + $0x11] sm:$0x1] 0.0
  %567 = vst [vmem:[#allocation3 + $0x29] sm:$0x1] 0.0
  %568 = vst [vmem:[#allocation3 + $0x1] sm:$0xff] %v560
  %569 = vst [vmem:[#allocation3 + $0x9] sm:$0xff] %v561
  %570 = vst [vmem:[#allocation3 + $0x19] sm:$0xff] %v562
  %571 = vst [vmem:[#allocation3 + $0x21] sm:$0xff] %v563
  %v572 = vld [vmem:[#allocation3] sm:$0xff]
  %v573 = vld [vmem:[#allocation3 + $0x8] sm:$0xff]
  %v574 = vld [vmem:[#allocation3 + $0x18] sm:$0xff]
  %v575 = vld [vmem:[#allocation3 + $0x20] sm:$0xff]
  %v576 = vld [vmem:[%s2] sm:$0xff]
  %v577 = vld [vmem:[%s2 + $0x8] sm:$0xff]
  %v578 = vld [vmem:[%s2 + $0x10] sm:$0xff]
  %v579 = vld [vmem:[%s2 + $0x18] sm:$0xff]
  %v580 = vld [vmem:[%s2 + $0x20] sm:$0xff]
  %v581 = vld [vmem:[%s2 + $0x28] sm:$0xff]
  %v582 = vld [vmem:[%s2 + $0x30] sm:$0xff]
  %v583 = vld [vmem:[%s2 + $0x38] sm:$0xff]
  %v584 = vld [vmem:[%s2 + $0x40] sm:$0xff]
  %v585 = vld [vmem:[%s2 + $0x48] sm:$0xff]
  %v586 = vld [vmem:[%s2 + $0x50] sm:$0xff]
  %v587 = vld [vmem:[%s2 + $0x58] sm:$0xff]
  %v588 = vld [vmem:[%s2 + $0x60] sm:$0xff]
  %v589 = vld [vmem:[%s2 + $0x68] sm:$0xff]
  %v590 = vld [vmem:[%s2 + $0x70] sm:$0xff]
  %v591 = vld [vmem:[%s2 + $0x78] sm:$0xff]
  %v592 = vld [vmem:[#allocation3 + $0x1] sm:$0xff]
  %v593 = vld [vmem:[#allocation3 + $0x9] sm:$0xff]
  %v594 = vld [vmem:[#allocation3 + $0x19] sm:$0xff]
  %v595 = vld [vmem:[#allocation3 + $0x21] sm:$0xff]
  %s596 = scalar_lea.vmem %s2, 128
  %v597 = vld [vmem:[%s596] sm:$0xff]
  %v598 = vld [vmem:[%s596 + $0x8] sm:$0xff]
  %v599 = vld [vmem:[%s596 + $0x10] sm:$0xff]
  %v600 = vld [vmem:[%s596 + $0x18] sm:$0xff]
  %v601 = vld [vmem:[%s596 + $0x20] sm:$0xff]
  %v602 = vld [vmem:[%s596 + $0x28] sm:$0xff]
  %v603 = vld [vmem:[%s596 + $0x30] sm:$0xff]
  %v604 = vld [vmem:[%s596 + $0x38] sm:$0xff]
  %v605 = vld [vmem:[%s596 + $0x40] sm:$0xff]
  %v606 = vld [vmem:[%s596 + $0x48] sm:$0xff]
  %v607 = vld [vmem:[%s596 + $0x50] sm:$0xff]
  %v608 = vld [vmem:[%s596 + $0x58] sm:$0xff]
  %v609 = vld [vmem:[%s596 + $0x60] sm:$0xff]
  %v610 = vld [vmem:[%s596 + $0x68] sm:$0xff]
  %v611 = vld [vmem:[%s596 + $0x70] sm:$0xff]
  %v612 = vld [vmem:[%s596 + $0x78] sm:$0xff]
  %613 = vmatpush.msra.mxu0 %v612
  %614 = vmatpush.msra.mxu0 %v611
  %615 = vmatpush.msra.mxu0 %v610
  %616 = vmatpush.msra.mxu0 %v609
  %617 = vmatpush.msra.mxu0 %v608
  %618 = vmatpush.msra.mxu0 %v607
  %619 = vmatpush.msra.mxu0 %v606
  %620 = vmatpush.msra.mxu0 %v605
  %621 = vmatpush.msra.mxu0 %v604
  %622 = vmatpush.msra.mxu0 %v603
  %623 = vmatpush.msra.mxu0 %v602
  %624 = vmatpush.msra.mxu0 %v601
  %625 = vmatpush.msra.mxu0 %v600
  %626 = vmatpush.msra.mxu0 %v599
  %627 = vmatpush.msra.mxu0 %v598
  %628 = vmatpush.msra.mxu0 %v597
  %629 = vmatmul.f32.gmra.mxu0 %v592
  %v630 = vpop.f32.mrf.mxu0
  %v631 = vadd.f32 0.0, %v630
  %632 = vmatmul.f32.gmra.mxu0 %v593
  %v633 = vpop.f32.mrf.mxu0
  %v634 = vadd.f32 0.0, %v633
  %635 = vmatmul.f32.gmra.mxu0 %v594
  %v636 = vpop.f32.mrf.mxu0
  %v637 = vadd.f32 0.0, %v636
  %638 = vmatmul.f32.gmra.mxu0 %v595
  %v639 = vpop.f32.mrf.mxu0
  %v640 = vadd.f32 0.0, %v639
  %641 = vdwg.mxu0
  %642 = vmatpush.msra.mxu0 %v591
  %643 = vmatpush.msra.mxu0 %v590
  %644 = vmatpush.msra.mxu0 %v589
  %645 = vmatpush.msra.mxu0 %v588
  %646 = vmatpush.msra.mxu0 %v587
  %647 = vmatpush.msra.mxu0 %v586
  %648 = vmatpush.msra.mxu0 %v585
  %649 = vmatpush.msra.mxu0 %v584
  %650 = vmatpush.msra.mxu0 %v583
  %651 = vmatpush.msra.mxu0 %v582
  %652 = vmatpush.msra.mxu0 %v581
  %653 = vmatpush.msra.mxu0 %v580
  %654 = vmatpush.msra.mxu0 %v579
  %655 = vmatpush.msra.mxu0 %v578
  %656 = vmatpush.msra.mxu0 %v577
  %657 = vmatpush.msra.mxu0 %v576
  %658 = vmatmul.f32.gmra.mxu0 %v572
  %v659 = vpop.f32.mrf.mxu0
  %v660 = vadd.f32 %v631, %v659
  %661 = vmatmul.f32.gmra.mxu0 %v573
  %v662 = vpop.f32.mrf.mxu0
  %v663 = vadd.f32 %v634, %v662
  %664 = vmatmul.f32.gmra.mxu0 %v574
  %v665 = vpop.f32.mrf.mxu0
  %v666 = vadd.f32 %v637, %v665
  %667 = vmatmul.f32.gmra.mxu0 %v575
  %v668 = vpop.f32.mrf.mxu0
  %v669 = vadd.f32 %v640, %v668
  %670 = vdwg.mxu0
  %v671 = vld [vmem:[#allocation3 + $0x2] sm:$0xff]
  %v672 = vld [vmem:[#allocation3 + $0xa] sm:$0xff]
  %v673 = vld [vmem:[#allocation3 + $0x1a] sm:$0xff]
  %v674 = vld [vmem:[#allocation3 + $0x22] sm:$0xff]
  %s675 = scalar_lea.vmem %s2, 256
  %v676 = vld [vmem:[%s675] sm:$0xff]
  %v677 = vld [vmem:[%s675 + $0x8] sm:$0xff]
  %v678 = vld [vmem:[%s675 + $0x10] sm:$0xff]
  %v679 = vld [vmem:[%s675 + $0x18] sm:$0xff]
  %v680 = vld [vmem:[%s675 + $0x20] sm:$0xff]
  %v681 = vld [vmem:[%s675 + $0x28] sm:$0xff]
  %v682 = vld [vmem:[%s675 + $0x30] sm:$0xff]
  %v683 = vld [vmem:[%s675 + $0x38] sm:$0xff]
  %v684 = vld [vmem:[%s675 + $0x40] sm:$0xff]
  %v685 = vld [vmem:[%s675 + $0x48] sm:$0xff]
  %v686 = vld [vmem:[%s675 + $0x50] sm:$0xff]
  %v687 = vld [vmem:[%s675 + $0x58] sm:$0xff]
  %v688 = vld [vmem:[%s675 + $0x60] sm:$0xff]
  %v689 = vld [vmem:[%s675 + $0x68] sm:$0xff]
  %v690 = vld [vmem:[%s675 + $0x70] sm:$0xff]
  %v691 = vld [vmem:[%s675 + $0x78] sm:$0xff]
  %692 = vmatpush.msra.mxu0 %v691
  %693 = vmatpush.msra.mxu0 %v690
  %694 = vmatpush.msra.mxu0 %v689
  %695 = vmatpush.msra.mxu0 %v688
  %696 = vmatpush.msra.mxu0 %v687
  %697 = vmatpush.msra.mxu0 %v686
  %698 = vmatpush.msra.mxu0 %v685
  %699 = vmatpush.msra.mxu0 %v684
  %700 = vmatpush.msra.mxu0 %v683
  %701 = vmatpush.msra.mxu0 %v682
  %702 = vmatpush.msra.mxu0 %v681
  %703 = vmatpush.msra.mxu0 %v680
  %704 = vmatpush.msra.mxu0 %v679
  %705 = vmatpush.msra.mxu0 %v678
  %706 = vmatpush.msra.mxu0 %v677
  %707 = vmatpush.msra.mxu0 %v676
  %708 = vmatmul.f32.gmra.mxu0 %v671
  %v709 = vpop.f32.mrf.mxu0
  %v710 = vadd.f32 0.0, %v709
  %711 = vmatmul.f32.gmra.mxu0 %v672
  %v712 = vpop.f32.mrf.mxu0
  %v713 = vadd.f32 0.0, %v712
  %714 = vmatmul.f32.gmra.mxu0 %v673
  %v715 = vpop.f32.mrf.mxu0
  %v716 = vadd.f32 0.0, %v715
  %717 = vmatmul.f32.gmra.mxu0 %v674
  %v718 = vpop.f32.mrf.mxu0
  %v719 = vadd.f32 0.0, %v718
  %720 = vdwg.mxu0
  %v721 = vadd.f32 %v660, %v710
  %v722 = vadd.f32 %v663, %v713
  %v723 = vadd.f32 %v666, %v716
  %v724 = vadd.f32 %v669, %v719
  %v725 = vld [vmem:[%s3 + $0x2] sm:$0x1]
  %v726 = vld [vmem:[%s3 + $0x3] sm:$0x1]
  %v727 = vadd.f32 %v721, %v722
  %v728 = vadd.f32 %v727, %v723
  %v729 = vadd.f32 %v728, %v724
  %v730 = vrot.slane %v729, 4
  %v731 = vadd.f32 %v729, %v730
  %v732 = vrot.slane %v731, 2
  %v733 = vadd.f32 %v731, %v732
  %v734 = vrot.slane %v733, 1
  %v735 = vadd.f32 %v733, %v734
  %736 = vmatpush.msra.mxu0 %v287
  %737 = vmatpush.msra.mxu0 %v286
  %738 = vmatpush.msra.mxu0 %v285
  %739 = vmatpush.msra.mxu0 %v284
  %740 = vmatpush.msra.mxu0 %v283
  %741 = vmatpush.msra.mxu0 %v282
  %742 = vmatpush.msra.mxu0 %v281
  %743 = vmatpush.msra.mxu0 %v280
  %744 = vmatpush.msra.mxu0 %v279
  %745 = vmatpush.msra.mxu0 %v278
  %746 = vmatpush.msra.mxu0 %v277
  %747 = vmatpush.msra.mxu0 %v276
  %748 = vmatpush.msra.mxu0 %v275
  %749 = vmatpush.msra.mxu0 %v274
  %750 = vmatpush.msra.mxu0 %v273
  %751 = vmatpush.msra.mxu0 %v272
  %752 = vmatmul.f32.gmra.mxu0 %v735
  %v753 = vpop.f32.mrf.mxu0
  %v754 = vadd.f32 0.0, %v753
  %755 = vdwg.mxu0
  %v756 = vmul.f32 %v754, 0.001953125
  %v757 = vperm.slane %v756, 0
  %v758 = vsub.f32 %v721, %v757
  %v759 = vsub.f32 %v722, %v757
  %v760 = vsub.f32 %v723, %v757
  %v761 = vsub.f32 %v724, %v757
  %v762 = vmul.f32 %v758, %v758
  %v763 = vmul.f32 %v759, %v759
  %v764 = vmul.f32 %v760, %v760
  %v765 = vmul.f32 %v761, %v761
  %v766 = vadd.f32 %v762, %v763
  %v767 = vadd.f32 %v766, %v764
  %v768 = vadd.f32 %v767, %v765
  %v769 = vrot.slane %v768, 4
  %v770 = vadd.f32 %v768, %v769
  %v771 = vrot.slane %v770, 2
  %v772 = vadd.f32 %v770, %v771
  %v773 = vrot.slane %v772, 1
  %v774 = vadd.f32 %v772, %v773
  %775 = vmatpush.msra.mxu0 %v287
  %776 = vmatpush.msra.mxu0 %v286
  %777 = vmatpush.msra.mxu0 %v285
  %778 = vmatpush.msra.mxu0 %v284
  %779 = vmatpush.msra.mxu0 %v283
  %780 = vmatpush.msra.mxu0 %v282
  %781 = vmatpush.msra.mxu0 %v281
  %782 = vmatpush.msra.mxu0 %v280
  %783 = vmatpush.msra.mxu0 %v279
  %784 = vmatpush.msra.mxu0 %v278
  %785 = vmatpush.msra.mxu0 %v277
  %786 = vmatpush.msra.mxu0 %v276
  %787 = vmatpush.msra.mxu0 %v275
  %788 = vmatpush.msra.mxu0 %v274
  %789 = vmatpush.msra.mxu0 %v273
  %790 = vmatpush.msra.mxu0 %v272
  %791 = vmatmul.f32.gmra.mxu0 %v774
  %v792 = vpop.f32.mrf.mxu0
  %v793 = vadd.f32 0.0, %v792
  %794 = vdwg.mxu0
  %v795 = vmul.f32 %v793, 0.001953125
  %v796 = vadd.f32 %v795, 1e-05
  %v797 = vrsqrt.pop %v796
  %v798 = vmul.f32 %v797, %v796
  %v799 = vmul.f32 %v798, %v797
  %v800 = vmul.f32 0.5, %v799
  %v801 = vsub.f32 1.5, %v800
  %v802 = vmul.f32 %v797, %v801
  %vm803 = vweird.f32 %v796
  %vm804 = vweird.f32 %v797
  %vm805 = vmor %vm803, %vm804
  %v806 = vsel %vm805, %v797, %v802
  %v807 = vmul.f32 %v725, %v806
  %v808 = vperm.slane %v807, 0
  %v809 = vmul.f32 %v758, %v808
  %v810 = vmul.f32 %v759, %v808
  %v811 = vmul.f32 %v760, %v808
  %v812 = vmul.f32 %v761, %v808
  %v813 = vperm.slane %v726, 0
  %v814 = vadd.f32 %v809, %v813
  %v815 = vadd.f32 %v810, %v813
  %v816 = vadd.f32 %v811, %v813
  %v817 = vadd.f32 %v812, %v813
  %v818 = vmax.f32 %v814, 0.0
  %v819 = vmax.f32 %v815, 0.0
  %v820 = vmax.f32 %v816, 0.0
  %v821 = vmax.f32 %v817, 0.0
  %822 = vst [vmem:[%s4] sm:$0xff] %v818
  %823 = vst [vmem:[%s4 + $0x8] sm:$0xff] %v819
  %824 = vst [vmem:[%s4 + $0x10] sm:$0xff] %v820
  %825 = vst [vmem:[%s4 + $0x18] sm:$0xff] %v821
  // Predicated region
  $region18: #{conv2d_block_forward.1} parent=0 // pred_check
    _
  $region19: #{conv2d_block_forward.1} parent=0 // pred_check_branch
    %827 = sbr.rel (0) target = $region21
  $region20: #{conv2d_block_forward.1} parent=0 // pred_region
    _
  $region21: #{conv2d_block_forward.1} parent=0 // pred_fallthru
    _
  // Predicated region
  $region22: #{conv2d_block_forward.1} parent=0 // pred_check
    _
  $region23: #{conv2d_block_forward.1} parent=0 // pred_check_branch
    %829 = sbr.rel (0) target = $region25
  $region24: #{conv2d_block_forward.1} parent=0 // pred_region
    _
  $region25: #{conv2d_block_forward.1} parent=0 // pred_fallthru
    _

</llo_original>
